<compile_context>
chip_gen: v7x
topology: tpu7x:2x2x1
jax: 0.10.0
libtpu: 0.0.40
codegen_flags: <defaults>
</compile_context>

<pallas_src>
import jax
import jax.numpy as jnp
from jax.experimental import pallas as pl
from jax.experimental.pallas import tpu as pltpu


# --------------------------------------------------------------------------
# Kernels
# --------------------------------------------------------------------------
def _conv1x1_vpu_kernel(x_ref, w_ref, b_ref, o_ref):
    """Tiny-channel path: unrolled VPU FMAs (no MXU push/drain latency).

    x_ref: (1, Cin, TS)  w_ref: (TCo, Cin)  b_ref: (TCo, 1)  o_ref: (1, TCo, TS)
    """
    x = x_ref[0].astype(jnp.float32)           # (Cin, TS)
    w = w_ref[...].astype(jnp.float32)         # (TCo, Cin)
    cin = x.shape[0]
    ts = x.shape[1]
    tco = w.shape[0]
    acc = jnp.broadcast_to(b_ref[...].astype(jnp.float32), (tco, ts))
    for ci in range(cin):                      # static, fully unrolled (Cin <= 32)
        acc = acc + w[:, ci:ci + 1] * x[ci:ci + 1, :]
    o_ref[0] = acc.astype(o_ref.dtype)


def _conv1x1_mxu_kernel(x_ref, w_ref, b_ref, o_ref):
    """Large-channel path: MXU matmul (TCo, Cin) @ (Cin, TS) with f32 accum."""
    acc = jax.lax.dot_general(
        w_ref[...], x_ref[0],
        dimension_numbers=(((1,), (0,)), ((), ())),
        preferred_element_type=jnp.float32)
    o_ref[0] = (acc + b_ref[...].astype(jnp.float32)).astype(o_ref.dtype)


# --------------------------------------------------------------------------
# Wrapper
# --------------------------------------------------------------------------
def _pick_spatial_tile(S, Cin, Cout, itemsize):
    """Largest lane-dense spatial tile that keeps blocks small in VMEM."""
    budget = 4 * 1024 * 1024                      # bytes per x / out block
    per_pos = itemsize * max(Cin, Cout, 1)
    cap = min(2048, max(128, (budget // per_pos) // 128 * 128))
    if S <= cap:
        return S                                  # full-extent block (always legal)
    divisor = None
    for ts in range(128, cap + 1, 128):           # largest 128-multiple divisor <= cap
        if S % ts == 0:
            divisor = ts
    if divisor is not None and divisor >= min(512, cap):
        return divisor
    return cap                                    # partial tail masked by Pallas


def conv1x1_ncdhw(x3, weight, bias):
    """x3: (N, Cin, S), weight: (Cout, Cin), bias: (Cout,) -> (N, Cout, S)."""
    N, Cin, S = x3.shape
    Cout = weight.shape[0]
    dtype = x3.dtype
    itemsize = jnp.dtype(dtype).itemsize

    TS = _pick_spatial_tile(S, Cin, Cout, itemsize)
    TCo = Cout if Cout <= 256 else 256            # tile Cout for huge channel counts
    grid = (N, pl.cdiv(Cout, TCo), pl.cdiv(S, TS))

    w2 = weight.reshape(Cout, Cin).astype(dtype)
    b2 = bias.reshape(Cout, 1).astype(dtype)

    kernel = _conv1x1_vpu_kernel if Cin <= 32 else _conv1x1_mxu_kernel

    # Rough double-buffered VMEM footprint -> scoped limit (capped for v7x).
    blk_bytes = itemsize * (Cin * TS + TCo * TS + TCo * Cin + TCo)
    vmem_limit = int(min(64 << 20, max(32 << 20, 4 * blk_bytes)))

    return pl.pallas_call(
        kernel,
        out_shape=jax.ShapeDtypeStruct((N, Cout, S), dtype),
        grid_spec=pltpu.PrefetchScalarGridSpec(
            num_scalar_prefetch=0,
            grid=grid,
            in_specs=[
                pl.BlockSpec((1, Cin, TS), lambda n, co, s: (n, 0, s)),   # x tile
                pl.BlockSpec((TCo, Cin), lambda n, co, s: (co, 0)),       # weight tile
                pl.BlockSpec((TCo, 1), lambda n, co, s: (co, 0)),         # bias tile
            ],
            out_specs=pl.BlockSpec((1, TCo, TS), lambda n, co, s: (n, co, s)),
        ),
        compiler_params=pltpu.CompilerParams(
            dimension_semantics=("parallel", "parallel", "parallel"),
            vmem_limit_bytes=vmem_limit,
        ),
    )(x3, w2, b2)


def out_forward(x_ncdhw, weight, bias):
    """Pallas equivalent of Out.forward (Conv3d with kernel_size=1).

    x_ncdhw: (N, Cin, D, H, W)
    weight:  (Cout, Cin, 1, 1, 1) or (Cout, Cin)
    bias:    (Cout,)
    returns  (N, Cout, D, H, W)
    """
    N, Cin, D, H, W = x_ncdhw.shape
    Cout = weight.shape[0]
    S = D * H * W
    x3 = x_ncdhw.reshape(N, Cin, S)               # free reshape (no HBM pass)
    y3 = conv1x1_ncdhw(x3, weight.reshape(Cout, Cin), bias)
    return y3.reshape(N, Cout, D, H, W)           # free reshape back


# --------------------------------------------------------------------------
# Self-test
# --------------------------------------------------------------------------
if __name__ == "__main__":
    # Small shapes consistent with the module: batch=2, in_channels=4,
    # out_channels=8, spatial D=4, H=32, W=32 -> S = 4096 spatial positions
    # (2 spatial tiles of 2048 per sample -> 4 grid steps total).
    N, Cin, Cout, D, H, W = 2, 4, 8, 4, 32, 32

    key = jax.random.PRNGKey(0)
    kx, kw, kb = jax.random.split(key, 3)

    x = jax.random.normal(kx, (N, Cin, D, H, W), dtype=jnp.float32)
    # Conv3d parameters: weight (Cout, Cin, 1, 1, 1), bias (Cout,)
    weight = jax.random.normal(kw, (Cout, Cin, 1, 1, 1), dtype=jnp.float32) * 0.1
    bias = jax.random.normal(kb, (Cout,), dtype=jnp.float32) * 0.1

    y = jax.block_until_ready(out_forward(x, weight, bias))

    # Pure-JAX reference.
    w2 = weight.reshape(Cout, Cin)
    y_ref = jnp.einsum("ncs,oc->nos", x.reshape(N, Cin, D * H * W), w2)
    y_ref = (y_ref + bias[None, :, None]).reshape(N, Cout, D, H, W)

    assert y.shape == (N, Cout, D, H, W)
    max_err = float(jnp.max(jnp.abs(y - y_ref)))
    assert jnp.allclose(y, y_ref, atol=1e-5, rtol=1e-5), max_err

    print("KERNEL_OK")
</pallas_src>

<mosaic_0001>
module attributes {stable_mosaic.version = 11 : i64} {
  func.func @_conv1x1_vpu_kernel(%arg0: i32, %arg1: i32, %arg2: i32, %arg3: memref<1x4x2048xf32, #tpu.memory_space<vmem>>, %arg4: memref<8x4xf32, #tpu.memory_space<vmem>>, %arg5: memref<8x1xf32, #tpu.memory_space<vmem>>, %arg6: memref<1x8x2048xf32, #tpu.memory_space<vmem>>) attributes {dimension_semantics = [#tpu.dimension_semantics<parallel>, #tpu.dimension_semantics<parallel>, #tpu.dimension_semantics<parallel>], iteration_bounds = array<i64: 2, 1, 2>, scalar_prefetch = 0 : i64, scratch_operands = 0 : i64, tpu.core_type = #tpu.core_type<tc>, window_params = [{transform_indices = @transform_0, window_bounds = array<i64: 1, 4, 2048>}, {transform_indices = @transform_1, window_bounds = array<i64: 8, 4>}, {transform_indices = @transform_2, window_bounds = array<i64: 8, 1>}, {transform_indices = @transform_3, window_bounds = array<i64: 1, 8, 2048>}]} {
    %c0 = arith.constant 0 : index
    %c0_0 = arith.constant 0 : index
    %c0_1 = arith.constant 0 : index
    %0 = vector.load %arg3[%c0, %c0_0, %c0_1] : memref<1x4x2048xf32, #tpu.memory_space<vmem>>, vector<1x4x2048xf32>
    %1 = vector.shape_cast %0 : vector<1x4x2048xf32> to vector<4x2048xf32>
    %c0_2 = arith.constant 0 : index
    %c0_3 = arith.constant 0 : index
    %2 = vector.load %arg4[%c0_2, %c0_3] : memref<8x4xf32, #tpu.memory_space<vmem>>, vector<8x4xf32>
    %c0_4 = arith.constant 0 : index
    %c0_5 = arith.constant 0 : index
    %3 = vector.load %arg5[%c0_4, %c0_5] : memref<8x1xf32, #tpu.memory_space<vmem>>, vector<8x1xf32>
    %4 = vector.shape_cast %3 : vector<8x1xf32> to vector<8x1xf32>
    %5 = vector.broadcast %4 : vector<8x1xf32> to vector<8x2048xf32>
    %6 = vector.extract_strided_slice %2 {offsets = [0, 0], sizes = [8, 1], strides = [1, 1]} : vector<8x4xf32> to vector<8x1xf32>
    %7 = vector.extract_strided_slice %1 {offsets = [0, 0], sizes = [1, 2048], strides = [1, 1]} : vector<4x2048xf32> to vector<1x2048xf32>
    %8 = vector.broadcast %6 : vector<8x1xf32> to vector<8x2048xf32>
    %9 = vector.broadcast %7 : vector<1x2048xf32> to vector<8x2048xf32>
    %10 = arith.mulf %8, %9 : vector<8x2048xf32>
    %11 = arith.addf %5, %10 : vector<8x2048xf32>
    %12 = vector.extract_strided_slice %2 {offsets = [0, 1], sizes = [8, 1], strides = [1, 1]} : vector<8x4xf32> to vector<8x1xf32>
    %13 = vector.extract_strided_slice %1 {offsets = [1, 0], sizes = [1, 2048], strides = [1, 1]} : vector<4x2048xf32> to vector<1x2048xf32>
    %14 = vector.broadcast %12 : vector<8x1xf32> to vector<8x2048xf32>
    %15 = vector.broadcast %13 : vector<1x2048xf32> to vector<8x2048xf32>
    %16 = arith.mulf %14, %15 : vector<8x2048xf32>
    %17 = arith.addf %11, %16 : vector<8x2048xf32>
    %18 = vector.extract_strided_slice %2 {offsets = [0, 2], sizes = [8, 1], strides = [1, 1]} : vector<8x4xf32> to vector<8x1xf32>
    %19 = vector.extract_strided_slice %1 {offsets = [2, 0], sizes = [1, 2048], strides = [1, 1]} : vector<4x2048xf32> to vector<1x2048xf32>
    %20 = vector.broadcast %18 : vector<8x1xf32> to vector<8x2048xf32>
    %21 = vector.broadcast %19 : vector<1x2048xf32> to vector<8x2048xf32>
    %22 = arith.mulf %20, %21 : vector<8x2048xf32>
    %23 = arith.addf %17, %22 : vector<8x2048xf32>
    %24 = vector.extract_strided_slice %2 {offsets = [0, 3], sizes = [8, 1], strides = [1, 1]} : vector<8x4xf32> to vector<8x1xf32>
    %25 = vector.extract_strided_slice %1 {offsets = [3, 0], sizes = [1, 2048], strides = [1, 1]} : vector<4x2048xf32> to vector<1x2048xf32>
    %26 = vector.broadcast %24 : vector<8x1xf32> to vector<8x2048xf32>
    %27 = vector.broadcast %25 : vector<1x2048xf32> to vector<8x2048xf32>
    %28 = arith.mulf %26, %27 : vector<8x2048xf32>
    %29 = arith.addf %23, %28 : vector<8x2048xf32>
    %c0_6 = arith.constant 0 : index
    %c0_7 = arith.constant 0 : index
    %c0_8 = arith.constant 0 : index
    %30 = vector.load %arg6[%c0_6, %c0_7, %c0_8] : memref<1x8x2048xf32, #tpu.memory_space<vmem>>, vector<1x8x2048xf32>
    %31 = vector.shape_cast %30 : vector<1x8x2048xf32> to vector<8x2048xf32>
    %32 = vector.shape_cast %29 : vector<8x2048xf32> to vector<1x8x2048xf32>
    tpu.vector_store %arg6[%c0_6, %c0_7, %c0_8], %32 {strides = array<i32>} : memref<1x8x2048xf32, #tpu.memory_space<vmem>>, vector<1x8x2048xf32>,
    return
  }
  func.func @transform_0(%arg0: i32, %arg1: i32, %arg2: i32) -> (i32, i32, i32) {
    %c0_i32 = arith.constant 0 : i32
    %c0_i32_0 = arith.constant 0 : i32
    return %arg0, %c0_i32, %arg2 : i32, i32, i32
  }
  func.func @transform_1(%arg0: i32, %arg1: i32, %arg2: i32) -> (i32, i32) {
    %c0_i32 = arith.constant 0 : i32
    %c0_i32_0 = arith.constant 0 : i32
    return %arg1, %c0_i32 : i32, i32
  }
  func.func @transform_2(%arg0: i32, %arg1: i32, %arg2: i32) -> (i32, i32) {
    %c0_i32 = arith.constant 0 : i32
    %c0_i32_0 = arith.constant 0 : i32
    return %arg1, %c0_i32 : i32, i32
  }
  func.func @transform_3(%arg0: i32, %arg1: i32, %arg2: i32) -> (i32, i32, i32) {
    %c0_i32 = arith.constant 0 : i32
    return %arg0, %arg1, %arg2 : i32, i32, i32
  }
}

</mosaic_0001>

<llo_original>
// kernel: tpu_custom_call.1
$region0: #{tpu_custom_call.1}
  #allocation0 [shape = 'u32[]', space=smem, size = 0x4, offset = 0x4, fixed_abs, tag = 'smem constant byte address 0x4 - core index']
  #allocation1 [shape = 'u32[144,128]{1,0:T(1,128)}', space=vmem, size = 0x12000, scoped, tag = 'internal scratch']
  %s0 = inlined_call_operand.hbm [shape: f32[2,4,4096], index: 0, kind: input, shape index: {}]
  %s1 = inlined_call_operand.vmem [shape: f32[8,4], index: 1, kind: input, shape index: {}]
  %s2 = inlined_call_operand.vmem [shape: f32[8,1], index: 2, kind: input, shape index: {}]
  %s3 = inlined_call_operand.hbm [shape: f32[2,8,4096], index: 3, kind: output, shape index: {}]
  %s4 = sld [smem:[#allocation0]]
  $region49: #{tpu_custom_call.1} parent=0
    _
  %s6 = ssub.s32 1, %s4
  %s7 = scalar_select 0, %s6, %s4
  $region1: #{tpu_custom_call.1} parent=0
    #allocation2 [shape = 'u8[65536]{0}', space=vmem, size = 0x10000, scoped, tag = 'input window, operand 0']
    #allocation3 [shape = 's32[2]{0}', space=sflag, size = 0x8, scoped, tag = 'scoped memory for tpu_custom_call.1']
    #allocation4 [shape = 's32[2]{0}', space=sflag, size = 0x8, scoped, tag = 'scoped memory for tpu_custom_call.1']
    #allocation5 [shape = 'u8[131072]{0}', space=vmem, size = 0x20000, scoped, tag = 'output window, operand 0']
    %8 = vsyncpa [#allocation3], 0
    %s9 = scalar_lea.sflag [#allocation3], 1
    %10 = vsyncpa %s9, 0
    %11 = vsyncpa [#allocation4], 0
    %s12 = scalar_lea.sflag [#allocation4], 1
    %13 = vsyncpa %s12, 0
    loop: start=0, step=1, limit=6
    $region2: #{tpu_custom_call.1} parent=1 // loop_pre_header
      _
    $region3: #{tpu_custom_call.1} parent=1 // loop_header
      %s15 = sphi 0, %s19
      %p16 = scmp.ge.s32.totalorder %s15, 6
      %s22 = sphi 0, %s41
      %s23 = sphi 0, %s37
      %s24 = sphi 0, %s33
      %s25 = sphi 0, %s22
      %s26 = sphi 0, %s23
      %s27 = sphi 0, %s24
      %s28 = sphi 0, %s25
      %s29 = sphi 0, %s26
      %s30 = sphi 0, %s27
      %s46 = sphi 0, %s48
      %s49 = sphi 0, %s46
      %s50 = sphi 0, %s49
      %s66 = sphi 0, %s50
      %s72 = sphi 0, %s74
      %s75 = sphi 0, %s72
      %s76 = sphi 0, %s75
      %s92 = sphi 0, %s76
      %s98 = sphi 0, %s100
      %s101 = sphi 0, %s98
      %s102 = sphi 0, %s101
      %s118 = sphi 0, %s102
      %s128 = sphi 0, %s130
      %s131 = sphi 0, %s128
      %s132 = sphi 0, %s131
      %s148 = sphi 0, %s132
    $region4: #{tpu_custom_call.1} parent=1 // loop_header_branch
      %18 = sbr.rel (%p16) target = $region8
    $region5: #{tpu_custom_call.1} parent=1 // loop_body
      %s20 = ssub.s32 %s15, 1
      %s21 = ssub.s32 %s15, 2
      %s31 = sadd.s32 1, %s24
      %p32 = scmp.ge.s32.totalorder %s31, 2
      %s33 = scalar_select %p32, 0, %s31
      %s34 = sadd.s32 1, %s23
      %s35 = scalar_select %p32, %s34, %s23
      %p36 = scmp.ge.s32.totalorder %s35, 1
      %s37 = scalar_select %p36, 0, %s35
      %s38 = sadd.s32 1, %s22
      %s39 = scalar_select %p36, %s38, %s22
      %p40 = scmp.ge.s32.totalorder %s39, 2
      %s41 = scalar_select %p40, 0, %s39
      %s42 = ssub.s32 %s22, %s41
      %s43 = ssub.s32 %s24, %s33
      %s44 = sor.u32 %s42, %s43
      %p45 = scmp.eq.s32.totalorder %s44, 0
      %s47 = sadd.s32 %s46, 1
      %s48 = scalar_select %p45, %s46, %s47
      %p51 = pneg %p45
      %p52 = scmp.eq.s32.totalorder %s15, 3
      %p53 = por %p51, %p52
      %p54 = scmp.ne.s32.totalorder %s46, %s49
      %p55 = scmp.eq.s32.totalorder %s15, 0
      %p56 = por %p54, %p55
      %p57 = scmp.ne.s32.totalorder %s46, %s49
      %p58 = scmp.eq.s32.totalorder %s20, 3
      %p59 = por %p57, %p58
      %p60 = scmp.ne.s32.totalorder %s49, %s50
      %p61 = scmp.eq.s32.totalorder %s20, 0
      %p62 = por %p60, %p61
      %p63 = scmp.ne.s32.totalorder %s49, %s50
      %p64 = scmp.eq.s32.totalorder %s21, 3
      %p65 = por %p63, %p64
      %p67 = scmp.ne.s32.totalorder %s50, %s66
      %p68 = scmp.eq.s32.totalorder %s21, 0
      %p69 = por %p67, %p68
      %s70 = ssub.s32 %s23, %s37
      %p71 = scmp.eq.s32.totalorder %s70, 0
      %s73 = sadd.s32 %s72, 1
      %s74 = scalar_select %p71, %s72, %s73
      %p77 = pneg %p71
      %p78 = scmp.eq.s32.totalorder %s15, 3
      %p79 = por %p77, %p78
      %p80 = scmp.ne.s32.totalorder %s72, %s75
      %p81 = scmp.eq.s32.totalorder %s15, 0
      %p82 = por %p80, %p81
      %p83 = scmp.ne.s32.totalorder %s72, %s75
      %p84 = scmp.eq.s32.totalorder %s20, 3
      %p85 = por %p83, %p84
      %p86 = scmp.ne.s32.totalorder %s75, %s76
      %p87 = scmp.eq.s32.totalorder %s20, 0
      %p88 = por %p86, %p87
      %p89 = scmp.ne.s32.totalorder %s75, %s76
      %p90 = scmp.eq.s32.totalorder %s21, 3
      %p91 = por %p89, %p90
      %p93 = scmp.ne.s32.totalorder %s76, %s92
      %p94 = scmp.eq.s32.totalorder %s21, 0
      %p95 = por %p93, %p94
      %s96 = ssub.s32 %s23, %s37
      %p97 = scmp.eq.s32.totalorder %s96, 0
      %s99 = sadd.s32 %s98, 1
      %s100 = scalar_select %p97, %s98, %s99
      %p103 = pneg %p97
      %p104 = scmp.eq.s32.totalorder %s15, 3
      %p105 = por %p103, %p104
      %p106 = scmp.ne.s32.totalorder %s98, %s101
      %p107 = scmp.eq.s32.totalorder %s15, 0
      %p108 = por %p106, %p107
      %p109 = scmp.ne.s32.totalorder %s98, %s101
      %p110 = scmp.eq.s32.totalorder %s20, 3
      %p111 = por %p109, %p110
      %p112 = scmp.ne.s32.totalorder %s101, %s102
      %p113 = scmp.eq.s32.totalorder %s20, 0
      %p114 = por %p112, %p113
      %p115 = scmp.ne.s32.totalorder %s101, %s102
      %p116 = scmp.eq.s32.totalorder %s21, 3
      %p117 = por %p115, %p116
      %p119 = scmp.ne.s32.totalorder %s102, %s118
      %p120 = scmp.eq.s32.totalorder %s21, 0
      %p121 = por %p119, %p120
      %s122 = ssub.s32 %s22, %s41
      %s123 = ssub.s32 %s23, %s37
      %s124 = sor.u32 %s122, %s123
      %s125 = ssub.s32 %s24, %s33
      %s126 = sor.u32 %s124, %s125
      %p127 = scmp.eq.s32.totalorder %s126, 0
      %s129 = sadd.s32 %s128, 1
      %s130 = scalar_select %p127, %s128, %s129
      %p133 = pneg %p127
      %p134 = scmp.eq.s32.totalorder %s15, 3
      %p135 = por %p133, %p134
      %p136 = scmp.ne.s32.totalorder %s128, %s131
      %p137 = scmp.eq.s32.totalorder %s15, 0
      %p138 = por %p136, %p137
      %p139 = scmp.ne.s32.totalorder %s128, %s131
      %p140 = scmp.eq.s32.totalorder %s20, 3
      %p141 = por %p139, %p140
      %p142 = scmp.ne.s32.totalorder %s131, %s132
      %p143 = scmp.eq.s32.totalorder %s20, 0
      %p144 = por %p142, %p143
      %p145 = scmp.ne.s32.totalorder %s131, %s132
      %p146 = scmp.eq.s32.totalorder %s21, 3
      %p147 = por %p145, %p146
      %p149 = scmp.ne.s32.totalorder %s132, %s148
      %p150 = scmp.eq.s32.totalorder %s21, 0
      %p151 = por %p149, %p150
      %p152 = scmp.le.s32.totalorder 1, %s15
      %p153 = scmp.lt.s32.totalorder %s15, 5
      %p154 = pnand %p152, %p153
      %p155 = pneg %p154
      // Predicated region
      $region9: #{tpu_custom_call.1} parent=5 // pred_check
        _
      $region10: #{tpu_custom_call.1} parent=5 // pred_check_branch
        %157 = sbr.rel (%p154) target = $region12
      $region11: #{tpu_custom_call.1} parent=5 // pred_region
        %s158 = ssub.s32 %s15, 1
        // Predicated region
        $region13: #{tpu_custom_call.1} parent=11 // pred_check
          %p159 = pneg %p88
        $region14: #{tpu_custom_call.1} parent=11 // pred_check_branch
          %161 = sbr.rel (%p159) target = $region16
        $region15: #{tpu_custom_call.1} parent=11 // pred_region
          %p162 = scmp.lt.s32.totalorder %s26, 0
          %s163 = scalar_select %p162, %s26, 0
          %s164 = smul.addr %s163, 8
          %s165 = scalar_lea.vmem %s1, %s164
        $region16: #{tpu_custom_call.1} parent=11 // pred_fallthru
          _
        // Predicated region
        $region17: #{tpu_custom_call.1} parent=11 // pred_check
          %p166 = pneg %p114
        $region18: #{tpu_custom_call.1} parent=11 // pred_check_branch
          %168 = sbr.rel (%p166) target = $region20
        $region19: #{tpu_custom_call.1} parent=11 // pred_region
          %p169 = scmp.lt.s32.totalorder %s26, 0
          %s170 = scalar_select %p169, %s26, 0
          %s171 = smul.addr %s170, 8
          %s172 = scalar_lea.vmem %s2, %s171
        $region20: #{tpu_custom_call.1} parent=11 // pred_fallthru
          _
      $region12: #{tpu_custom_call.1} parent=5 // pred_fallthru
        _
      %p173 = scmp.lt.s32.totalorder %s15, 4
      // Predicated region
      $region21: #{tpu_custom_call.1} parent=5 // pred_check
        %p174 = pneg %p173
      $region22: #{tpu_custom_call.1} parent=5 // pred_check_branch
        %176 = sbr.rel (%p174) target = $region24
      $region23: #{tpu_custom_call.1} parent=5 // pred_region
        // Predicated region
        $region25: #{tpu_custom_call.1} parent=23 // pred_check
          %p177 = pneg %p56
        $region26: #{tpu_custom_call.1} parent=23 // pred_check_branch
          %179 = sbr.rel (%p177) target = $region28
        $region27: #{tpu_custom_call.1} parent=23 // pred_region
          %s180 = sand.u32 %s46, 1
          %s181 = scalar_lea.sflag [#allocation3], %s180
          %s182 = sand.u32 %s46, 1
          %s183 = smul.addr %s182, 64
          %s184 = scalar_lea.vmem [#allocation2], %s183
          %s185 = smul.u32 16, %s24
          %s187 = ssub.s32 1024, 1024
          %188 = vsyncadd %s181, %s187
          %s189 = smul.addr %s22, 32
          %s190 = sadd.s32 %s185, %s189
          %s191 = smul.addr %s190, 64
          %s192 = scalar_lea.hbm %s0, %s191
          %s194 = sshll.u32 %s184, 4
          %s195 = int_to_ptr.vmem [resolvable:$true] %s194
          %197 = dma.hbm_to_vmem [thread:$0]  %s192, 1024, %s195, %s181
        $region28: #{tpu_custom_call.1} parent=23 // pred_fallthru
          _
      $region24: #{tpu_custom_call.1} parent=5 // pred_fallthru
        _
      %p198 = scmp.le.s32.totalorder 1, %s15
      %p199 = scmp.lt.s32.totalorder %s15, 5
      %p200 = pnand %p198, %p199
      %p201 = pneg %p200
      // Predicated region
      $region29: #{tpu_custom_call.1} parent=5 // pred_check
        _
      $region30: #{tpu_custom_call.1} parent=5 // pred_check_branch
        %203 = sbr.rel (%p200) target = $region32
      $region31: #{tpu_custom_call.1} parent=5 // pred_region
        %s204 = ssub.s32 %s15, 1
        %s205 = sand.u32 %s49, 1
        %s206 = scalar_lea.sflag [#allocation3], %s205
        %s207 = sand.u32 %s49, 1
        %s208 = smul.addr %s207, 64
        %s209 = scalar_lea.vmem [#allocation2], %s208
        // Predicated region
        $region33: #{tpu_custom_call.1} parent=31 // pred_check
          %p210 = pneg %p62
        $region34: #{tpu_custom_call.1} parent=31 // pred_check_branch
          %212 = sbr.rel (%p210) target = $region36
        $region35: #{tpu_custom_call.1} parent=31 // pred_region
          %213 = dma.done %s206, 1024
        $region36: #{tpu_custom_call.1} parent=31 // pred_fallthru
          _
        %s214 = sand.u32 %s49, 1
        %s215 = scalar_lea.sflag [#allocation3], %s214
        %s216 = sand.u32 %s49, 1
        %s217 = smul.addr %s216, 64
        %s218 = scalar_lea.vmem [#allocation2], %s217
        %p219 = pneg %p62
        %p220 = pneg %p59
        %p221 = scmp.lt.s32.totalorder %s26, 0
        %s222 = scalar_select %p221, %s26, 0
        %s223 = smul.addr %s222, 8
        %s224 = scalar_lea.vmem %s1, %s223
        %p225 = pneg %p88
        %p226 = pneg %p85
        %p227 = scmp.lt.s32.totalorder %s26, 0
        %s228 = scalar_select %p227, %s26, 0
        %s229 = smul.addr %s228, 8
        %s230 = scalar_lea.vmem %s2, %s229
        %p231 = pneg %p114
        %p232 = pneg %p111
        %p233 = pneg %p144
        %p234 = pneg %p141
        %s235 = sand.u32 %s131, 1
        %s236 = scalar_lea.sflag [#allocation4], %s235
        %s237 = sand.u32 %s131, 1
        %s238 = smul.addr %s237, 128
        %s239 = scalar_lea.vmem [#allocation5], %s238
        %s240 = smul.u32 16, %s27
        %p241 = scmp.lt.s32.totalorder %s26, 0
        %s242 = scalar_select %p241, %s26, 0
        %s243 = smul.addr %s242, 8
        %s244 = scalar_lea.vmem %s1, %s243
        %p245 = scmp.lt.s32.totalorder %s26, 0
        %s246 = scalar_select %p245, %s26, 0
        %s247 = smul.addr %s246, 8
        %s248 = scalar_lea.vmem %s2, %s247
        %s249 = smul.u32 16, %s27
        %v250 = vld [vmem:[%s209] sm:$0xff]
        %v251 = vld [vmem:[%s209 + $0x8] sm:$0xff]
        %v252 = vld [vmem:[%s209 + $0x10] sm:$0xff]
        %v253 = vld [vmem:[%s209 + $0x18] sm:$0xff]
        %v254 = vld [vmem:[%s209 + $0x20] sm:$0xff]
        %v255 = vld [vmem:[%s209 + $0x28] sm:$0xff]
        %v256 = vld [vmem:[%s209 + $0x30] sm:$0xff]
        %v257 = vld [vmem:[%s209 + $0x38] sm:$0xff]
        %v258 = vld [vmem:[%s244] sm:$0xff]
        %v259 = vld [vmem:[%s248] sm:$0xff]
        %261 = vset.pattern.permute.xlu0 0
        %262 = vperm.xlu0 %261, %v259
        %v263 = vpop.permute.xlu0 %262
        %266 = vset.pattern.permute.xlu0 0
        %267 = vperm.xlu0 %266, %v258
        %v268 = vpop.permute.xlu0 %267
        %v278 = vlaneseq
        %v279 = vshrl.u32 %v278, 7
        %v280 = vsub.s32 0, %v279
        %v281 = vrot.slane %v250, %v280
        %v282 = vlaneseq
        %v283 = vshrl.u32 %v282, 7
        %v284 = vsub.s32 4, %v283
        %v285 = vrot.slane %v250, %v284
        %v286 = vlaneseq
        %v287 = vshrl.u32 %v286, 7
        %v288 = vsub.s32 0, %v287
        %v289 = vrot.slane %v251, %v288
        %v290 = vlaneseq
        %v291 = vshrl.u32 %v290, 7
        %v292 = vsub.s32 4, %v291
        %v293 = vrot.slane %v251, %v292
        %v294 = vlaneseq
        %v295 = vshrl.u32 %v294, 7
        %v296 = vsub.s32 0, %v295
        %v297 = vrot.slane %v252, %v296
        %v298 = vlaneseq
        %v299 = vshrl.u32 %v298, 7
        %v300 = vsub.s32 4, %v299
        %v301 = vrot.slane %v252, %v300
        %v302 = vlaneseq
        %v303 = vshrl.u32 %v302, 7
        %v304 = vsub.s32 0, %v303
        %v305 = vrot.slane %v253, %v304
        %v306 = vlaneseq
        %v307 = vshrl.u32 %v306, 7
        %v308 = vsub.s32 4, %v307
        %v309 = vrot.slane %v253, %v308
        %v310 = vlaneseq
        %v311 = vshrl.u32 %v310, 7
        %v312 = vsub.s32 0, %v311
        %v313 = vrot.slane %v254, %v312
        %v314 = vlaneseq
        %v315 = vshrl.u32 %v314, 7
        %v316 = vsub.s32 4, %v315
        %v317 = vrot.slane %v254, %v316
        %v318 = vlaneseq
        %v319 = vshrl.u32 %v318, 7
        %v320 = vsub.s32 0, %v319
        %v321 = vrot.slane %v255, %v320
        %v322 = vlaneseq
        %v323 = vshrl.u32 %v322, 7
        %v324 = vsub.s32 4, %v323
        %v325 = vrot.slane %v255, %v324
        %v326 = vlaneseq
        %v327 = vshrl.u32 %v326, 7
        %v328 = vsub.s32 0, %v327
        %v329 = vrot.slane %v256, %v328
        %v330 = vlaneseq
        %v331 = vshrl.u32 %v330, 7
        %v332 = vsub.s32 4, %v331
        %v333 = vrot.slane %v256, %v332
        %v334 = vlaneseq
        %v335 = vshrl.u32 %v334, 7
        %v336 = vsub.s32 0, %v335
        %v337 = vrot.slane %v257, %v336
        %v338 = vlaneseq
        %v339 = vshrl.u32 %v338, 7
        %v340 = vsub.s32 4, %v339
        %v341 = vrot.slane %v257, %v340
        %v358 = vlaneseq
        %v359 = vshrl.u32 %v358, 7
        %v360 = vsub.s32 0, %v359
        %v361 = vrot.slane %v281, %v360
        %v362 = vlaneseq
        %v363 = vshrl.u32 %v362, 7
        %v364 = vsub.s32 0, %v363
        %v365 = vrot.slane %v285, %v364
        %v366 = vlaneseq
        %v367 = vshrl.u32 %v366, 7
        %v368 = vsub.s32 0, %v367
        %v369 = vrot.slane %v289, %v368
        %v370 = vlaneseq
        %v371 = vshrl.u32 %v370, 7
        %v372 = vsub.s32 0, %v371
        %v373 = vrot.slane %v293, %v372
        %v374 = vlaneseq
        %v375 = vshrl.u32 %v374, 7
        %v376 = vsub.s32 0, %v375
        %v377 = vrot.slane %v297, %v376
        %v378 = vlaneseq
        %v379 = vshrl.u32 %v378, 7
        %v380 = vsub.s32 0, %v379
        %v381 = vrot.slane %v301, %v380
        %v382 = vlaneseq
        %v383 = vshrl.u32 %v382, 7
        %v384 = vsub.s32 0, %v383
        %v385 = vrot.slane %v305, %v384
        %v386 = vlaneseq
        %v387 = vshrl.u32 %v386, 7
        %v388 = vsub.s32 0, %v387
        %v389 = vrot.slane %v309, %v388
        %v390 = vlaneseq
        %v391 = vshrl.u32 %v390, 7
        %v392 = vsub.s32 0, %v391
        %v393 = vrot.slane %v313, %v392
        %v394 = vlaneseq
        %v395 = vshrl.u32 %v394, 7
        %v396 = vsub.s32 0, %v395
        %v397 = vrot.slane %v317, %v396
        %v398 = vlaneseq
        %v399 = vshrl.u32 %v398, 7
        %v400 = vsub.s32 0, %v399
        %v401 = vrot.slane %v321, %v400
        %v402 = vlaneseq
        %v403 = vshrl.u32 %v402, 7
        %v404 = vsub.s32 0, %v403
        %v405 = vrot.slane %v325, %v404
        %v406 = vlaneseq
        %v407 = vshrl.u32 %v406, 7
        %v408 = vsub.s32 0, %v407
        %v409 = vrot.slane %v329, %v408
        %v410 = vlaneseq
        %v411 = vshrl.u32 %v410, 7
        %v412 = vsub.s32 0, %v411
        %v413 = vrot.slane %v333, %v412
        %v414 = vlaneseq
        %v415 = vshrl.u32 %v414, 7
        %v416 = vsub.s32 0, %v415
        %v417 = vrot.slane %v337, %v416
        %v418 = vlaneseq
        %v419 = vshrl.u32 %v418, 7
        %v420 = vsub.s32 0, %v419
        %v421 = vrot.slane %v341, %v420
        %v422 = vmul.f32 %v268, %v361
        %v423 = vmul.f32 %v268, %v365
        %v424 = vmul.f32 %v268, %v369
        %v425 = vmul.f32 %v268, %v373
        %v426 = vmul.f32 %v268, %v377
        %v427 = vmul.f32 %v268, %v381
        %v428 = vmul.f32 %v268, %v385
        %v429 = vmul.f32 %v268, %v389
        %v430 = vmul.f32 %v268, %v393
        %v431 = vmul.f32 %v268, %v397
        %v432 = vmul.f32 %v268, %v401
        %v433 = vmul.f32 %v268, %v405
        %v434 = vmul.f32 %v268, %v409
        %v435 = vmul.f32 %v268, %v413
        %v436 = vmul.f32 %v268, %v417
        %v437 = vmul.f32 %v268, %v421
        %v438 = vadd.f32 %v263, %v422
        %v439 = vadd.f32 %v263, %v423
        %v440 = vadd.f32 %v263, %v424
        %v441 = vadd.f32 %v263, %v425
        %v442 = vadd.f32 %v263, %v426
        %v443 = vadd.f32 %v263, %v427
        %v444 = vadd.f32 %v263, %v428
        %v445 = vadd.f32 %v263, %v429
        %v446 = vadd.f32 %v263, %v430
        %v447 = vadd.f32 %v263, %v431
        %v448 = vadd.f32 %v263, %v432
        %v449 = vadd.f32 %v263, %v433
        %v450 = vadd.f32 %v263, %v434
        %v451 = vadd.f32 %v263, %v435
        %v452 = vadd.f32 %v263, %v436
        %v453 = vadd.f32 %v263, %v437
        %454 = vset.pattern.permute.xlu0 1
        %455 = vperm.xlu0 %454, %v258
        %v456 = vpop.permute.xlu0 %455
        %v458 = vlaneseq
        %v459 = vshrl.u32 %v458, 7
        %v460 = vsub.s32 1, %v459
        %v461 = vrot.slane %v250, %v460
        %v462 = vlaneseq
        %v463 = vshrl.u32 %v462, 7
        %v464 = vsub.s32 5, %v463
        %v465 = vrot.slane %v250, %v464
        %v466 = vlaneseq
        %v467 = vshrl.u32 %v466, 7
        %v468 = vsub.s32 1, %v467
        %v469 = vrot.slane %v251, %v468
        %v470 = vlaneseq
        %v471 = vshrl.u32 %v470, 7
        %v472 = vsub.s32 5, %v471
        %v473 = vrot.slane %v251, %v472
        %v474 = vlaneseq
        %v475 = vshrl.u32 %v474, 7
        %v476 = vsub.s32 1, %v475
        %v477 = vrot.slane %v252, %v476
        %v478 = vlaneseq
        %v479 = vshrl.u32 %v478, 7
        %v480 = vsub.s32 5, %v479
        %v481 = vrot.slane %v252, %v480
        %v482 = vlaneseq
        %v483 = vshrl.u32 %v482, 7
        %v484 = vsub.s32 1, %v483
        %v485 = vrot.slane %v253, %v484
        %v486 = vlaneseq
        %v487 = vshrl.u32 %v486, 7
        %v488 = vsub.s32 5, %v487
        %v489 = vrot.slane %v253, %v488
        %v490 = vlaneseq
        %v491 = vshrl.u32 %v490, 7
        %v492 = vsub.s32 1, %v491
        %v493 = vrot.slane %v254, %v492
        %v494 = vlaneseq
        %v495 = vshrl.u32 %v494, 7
        %v496 = vsub.s32 5, %v495
        %v497 = vrot.slane %v254, %v496
        %v498 = vlaneseq
        %v499 = vshrl.u32 %v498, 7
        %v500 = vsub.s32 1, %v499
        %v501 = vrot.slane %v255, %v500
        %v502 = vlaneseq
        %v503 = vshrl.u32 %v502, 7
        %v504 = vsub.s32 5, %v503
        %v505 = vrot.slane %v255, %v504
        %v506 = vlaneseq
        %v507 = vshrl.u32 %v506, 7
        %v508 = vsub.s32 1, %v507
        %v509 = vrot.slane %v256, %v508
        %v510 = vlaneseq
        %v511 = vshrl.u32 %v510, 7
        %v512 = vsub.s32 5, %v511
        %v513 = vrot.slane %v256, %v512
        %v514 = vlaneseq
        %v515 = vshrl.u32 %v514, 7
        %v516 = vsub.s32 1, %v515
        %v517 = vrot.slane %v257, %v516
        %v518 = vlaneseq
        %v519 = vshrl.u32 %v518, 7
        %v520 = vsub.s32 5, %v519
        %v521 = vrot.slane %v257, %v520
        %v538 = vlaneseq
        %v539 = vshrl.u32 %v538, 7
        %v540 = vsub.s32 1, %v539
        %v541 = vrot.slane %v461, %v540
        %v542 = vlaneseq
        %v543 = vshrl.u32 %v542, 7
        %v544 = vsub.s32 1, %v543
        %v545 = vrot.slane %v465, %v544
        %v546 = vlaneseq
        %v547 = vshrl.u32 %v546, 7
        %v548 = vsub.s32 1, %v547
        %v549 = vrot.slane %v469, %v548
        %v550 = vlaneseq
        %v551 = vshrl.u32 %v550, 7
        %v552 = vsub.s32 1, %v551
        %v553 = vrot.slane %v473, %v552
        %v554 = vlaneseq
        %v555 = vshrl.u32 %v554, 7
        %v556 = vsub.s32 1, %v555
        %v557 = vrot.slane %v477, %v556
        %v558 = vlaneseq
        %v559 = vshrl.u32 %v558, 7
        %v560 = vsub.s32 1, %v559
        %v561 = vrot.slane %v481, %v560
        %v562 = vlaneseq
        %v563 = vshrl.u32 %v562, 7
        %v564 = vsub.s32 1, %v563
        %v565 = vrot.slane %v485, %v564
        %v566 = vlaneseq
        %v567 = vshrl.u32 %v566, 7
        %v568 = vsub.s32 1, %v567
        %v569 = vrot.slane %v489, %v568
        %v570 = vlaneseq
        %v571 = vshrl.u32 %v570, 7
        %v572 = vsub.s32 1, %v571
        %v573 = vrot.slane %v493, %v572
        %v574 = vlaneseq
        %v575 = vshrl.u32 %v574, 7
        %v576 = vsub.s32 1, %v575
        %v577 = vrot.slane %v497, %v576
        %v578 = vlaneseq
        %v579 = vshrl.u32 %v578, 7
        %v580 = vsub.s32 1, %v579
        %v581 = vrot.slane %v501, %v580
        %v582 = vlaneseq
        %v583 = vshrl.u32 %v582, 7
        %v584 = vsub.s32 1, %v583
        %v585 = vrot.slane %v505, %v584
        %v586 = vlaneseq
        %v587 = vshrl.u32 %v586, 7
        %v588 = vsub.s32 1, %v587
        %v589 = vrot.slane %v509, %v588
        %v590 = vlaneseq
        %v591 = vshrl.u32 %v590, 7
        %v592 = vsub.s32 1, %v591
        %v593 = vrot.slane %v513, %v592
        %v594 = vlaneseq
        %v595 = vshrl.u32 %v594, 7
        %v596 = vsub.s32 1, %v595
        %v597 = vrot.slane %v517, %v596
        %v598 = vlaneseq
        %v599 = vshrl.u32 %v598, 7
        %v600 = vsub.s32 1, %v599
        %v601 = vrot.slane %v521, %v600
        %v602 = vmul.f32 %v456, %v541
        %v603 = vmul.f32 %v456, %v545
        %v604 = vmul.f32 %v456, %v549
        %v605 = vmul.f32 %v456, %v553
        %v606 = vmul.f32 %v456, %v557
        %v607 = vmul.f32 %v456, %v561
        %v608 = vmul.f32 %v456, %v565
        %v609 = vmul.f32 %v456, %v569
        %v610 = vmul.f32 %v456, %v573
        %v611 = vmul.f32 %v456, %v577
        %v612 = vmul.f32 %v456, %v581
        %v613 = vmul.f32 %v456, %v585
        %v614 = vmul.f32 %v456, %v589
        %v615 = vmul.f32 %v456, %v593
        %v616 = vmul.f32 %v456, %v597
        %v617 = vmul.f32 %v456, %v601
        %v618 = vadd.f32 %v438, %v602
        %v619 = vadd.f32 %v439, %v603
        %v620 = vadd.f32 %v440, %v604
        %v621 = vadd.f32 %v441, %v605
        %v622 = vadd.f32 %v442, %v606
        %v623 = vadd.f32 %v443, %v607
        %v624 = vadd.f32 %v444, %v608
        %v625 = vadd.f32 %v445, %v609
        %v626 = vadd.f32 %v446, %v610
        %v627 = vadd.f32 %v447, %v611
        %v628 = vadd.f32 %v448, %v612
        %v629 = vadd.f32 %v449, %v613
        %v630 = vadd.f32 %v450, %v614
        %v631 = vadd.f32 %v451, %v615
        %v632 = vadd.f32 %v452, %v616
        %v633 = vadd.f32 %v453, %v617
        %634 = vset.pattern.permute.xlu0 2
        %635 = vperm.xlu0 %634, %v258
        %v636 = vpop.permute.xlu0 %635
        %v638 = vlaneseq
        %v639 = vshrl.u32 %v638, 7
        %v640 = vsub.s32 2, %v639
        %v641 = vrot.slane %v250, %v640
        %v642 = vlaneseq
        %v643 = vshrl.u32 %v642, 7
        %v644 = vsub.s32 6, %v643
        %v645 = vrot.slane %v250, %v644
        %v646 = vlaneseq
        %v647 = vshrl.u32 %v646, 7
        %v648 = vsub.s32 2, %v647
        %v649 = vrot.slane %v251, %v648
        %v650 = vlaneseq
        %v651 = vshrl.u32 %v650, 7
        %v652 = vsub.s32 6, %v651
        %v653 = vrot.slane %v251, %v652
        %v654 = vlaneseq
        %v655 = vshrl.u32 %v654, 7
        %v656 = vsub.s32 2, %v655
        %v657 = vrot.slane %v252, %v656
        %v658 = vlaneseq
        %v659 = vshrl.u32 %v658, 7
        %v660 = vsub.s32 6, %v659
        %v661 = vrot.slane %v252, %v660
        %v662 = vlaneseq
        %v663 = vshrl.u32 %v662, 7
        %v664 = vsub.s32 2, %v663
        %v665 = vrot.slane %v253, %v664
        %v666 = vlaneseq
        %v667 = vshrl.u32 %v666, 7
        %v668 = vsub.s32 6, %v667
        %v669 = vrot.slane %v253, %v668
        %v670 = vlaneseq
        %v671 = vshrl.u32 %v670, 7
        %v672 = vsub.s32 2, %v671
        %v673 = vrot.slane %v254, %v672
        %v674 = vlaneseq
        %v675 = vshrl.u32 %v674, 7
        %v676 = vsub.s32 6, %v675
        %v677 = vrot.slane %v254, %v676
        %v678 = vlaneseq
        %v679 = vshrl.u32 %v678, 7
        %v680 = vsub.s32 2, %v679
        %v681 = vrot.slane %v255, %v680
        %v682 = vlaneseq
        %v683 = vshrl.u32 %v682, 7
        %v684 = vsub.s32 6, %v683
        %v685 = vrot.slane %v255, %v684
        %v686 = vlaneseq
        %v687 = vshrl.u32 %v686, 7
        %v688 = vsub.s32 2, %v687
        %v689 = vrot.slane %v256, %v688
        %v690 = vlaneseq
        %v691 = vshrl.u32 %v690, 7
        %v692 = vsub.s32 6, %v691
        %v693 = vrot.slane %v256, %v692
        %v694 = vlaneseq
        %v695 = vshrl.u32 %v694, 7
        %v696 = vsub.s32 2, %v695
        %v697 = vrot.slane %v257, %v696
        %v698 = vlaneseq
        %v699 = vshrl.u32 %v698, 7
        %v700 = vsub.s32 6, %v699
        %v701 = vrot.slane %v257, %v700
        %v718 = vlaneseq
        %v719 = vshrl.u32 %v718, 7
        %v720 = vsub.s32 2, %v719
        %v721 = vrot.slane %v641, %v720
        %v722 = vlaneseq
        %v723 = vshrl.u32 %v722, 7
        %v724 = vsub.s32 2, %v723
        %v725 = vrot.slane %v645, %v724
        %v726 = vlaneseq
        %v727 = vshrl.u32 %v726, 7
        %v728 = vsub.s32 2, %v727
        %v729 = vrot.slane %v649, %v728
        %v730 = vlaneseq
        %v731 = vshrl.u32 %v730, 7
        %v732 = vsub.s32 2, %v731
        %v733 = vrot.slane %v653, %v732
        %v734 = vlaneseq
        %v735 = vshrl.u32 %v734, 7
        %v736 = vsub.s32 2, %v735
        %v737 = vrot.slane %v657, %v736
        %v738 = vlaneseq
        %v739 = vshrl.u32 %v738, 7
        %v740 = vsub.s32 2, %v739
        %v741 = vrot.slane %v661, %v740
        %v742 = vlaneseq
        %v743 = vshrl.u32 %v742, 7
        %v744 = vsub.s32 2, %v743
        %v745 = vrot.slane %v665, %v744
        %v746 = vlaneseq
        %v747 = vshrl.u32 %v746, 7
        %v748 = vsub.s32 2, %v747
        %v749 = vrot.slane %v669, %v748
        %v750 = vlaneseq
        %v751 = vshrl.u32 %v750, 7
        %v752 = vsub.s32 2, %v751
        %v753 = vrot.slane %v673, %v752
        %v754 = vlaneseq
        %v755 = vshrl.u32 %v754, 7
        %v756 = vsub.s32 2, %v755
        %v757 = vrot.slane %v677, %v756
        %v758 = vlaneseq
        %v759 = vshrl.u32 %v758, 7
        %v760 = vsub.s32 2, %v759
        %v761 = vrot.slane %v681, %v760
        %v762 = vlaneseq
        %v763 = vshrl.u32 %v762, 7
        %v764 = vsub.s32 2, %v763
        %v765 = vrot.slane %v685, %v764
        %v766 = vlaneseq
        %v767 = vshrl.u32 %v766, 7
        %v768 = vsub.s32 2, %v767
        %v769 = vrot.slane %v689, %v768
        %v770 = vlaneseq
        %v771 = vshrl.u32 %v770, 7
        %v772 = vsub.s32 2, %v771
        %v773 = vrot.slane %v693, %v772
        %v774 = vlaneseq
        %v775 = vshrl.u32 %v774, 7
        %v776 = vsub.s32 2, %v775
        %v777 = vrot.slane %v697, %v776
        %v778 = vlaneseq
        %v779 = vshrl.u32 %v778, 7
        %v780 = vsub.s32 2, %v779
        %v781 = vrot.slane %v701, %v780
        %v782 = vmul.f32 %v636, %v721
        %v783 = vmul.f32 %v636, %v725
        %v784 = vmul.f32 %v636, %v729
        %v785 = vmul.f32 %v636, %v733
        %v786 = vmul.f32 %v636, %v737
        %v787 = vmul.f32 %v636, %v741
        %v788 = vmul.f32 %v636, %v745
        %v789 = vmul.f32 %v636, %v749
        %v790 = vmul.f32 %v636, %v753
        %v791 = vmul.f32 %v636, %v757
        %v792 = vmul.f32 %v636, %v761
        %v793 = vmul.f32 %v636, %v765
        %v794 = vmul.f32 %v636, %v769
        %v795 = vmul.f32 %v636, %v773
        %v796 = vmul.f32 %v636, %v777
        %v797 = vmul.f32 %v636, %v781
        %v798 = vadd.f32 %v618, %v782
        %v799 = vadd.f32 %v619, %v783
        %v800 = vadd.f32 %v620, %v784
        %v801 = vadd.f32 %v621, %v785
        %v802 = vadd.f32 %v622, %v786
        %v803 = vadd.f32 %v623, %v787
        %v804 = vadd.f32 %v624, %v788
        %v805 = vadd.f32 %v625, %v789
        %v806 = vadd.f32 %v626, %v790
        %v807 = vadd.f32 %v627, %v791
        %v808 = vadd.f32 %v628, %v792
        %v809 = vadd.f32 %v629, %v793
        %v810 = vadd.f32 %v630, %v794
        %v811 = vadd.f32 %v631, %v795
        %v812 = vadd.f32 %v632, %v796
        %v813 = vadd.f32 %v633, %v797
        %814 = vset.pattern.permute.xlu0 3
        %815 = vperm.xlu0 %814, %v258
        %v816 = vpop.permute.xlu0 %815
        %v818 = vlaneseq
        %v819 = vshrl.u32 %v818, 7
        %v820 = vsub.s32 3, %v819
        %v821 = vrot.slane %v250, %v820
        %v822 = vlaneseq
        %v823 = vshrl.u32 %v822, 7
        %v824 = vsub.s32 7, %v823
        %v825 = vrot.slane %v250, %v824
        %v826 = vlaneseq
        %v827 = vshrl.u32 %v826, 7
        %v828 = vsub.s32 3, %v827
        %v829 = vrot.slane %v251, %v828
        %v830 = vlaneseq
        %v831 = vshrl.u32 %v830, 7
        %v832 = vsub.s32 7, %v831
        %v833 = vrot.slane %v251, %v832
        %v834 = vlaneseq
        %v835 = vshrl.u32 %v834, 7
        %v836 = vsub.s32 3, %v835
        %v837 = vrot.slane %v252, %v836
        %v838 = vlaneseq
        %v839 = vshrl.u32 %v838, 7
        %v840 = vsub.s32 7, %v839
        %v841 = vrot.slane %v252, %v840
        %v842 = vlaneseq
        %v843 = vshrl.u32 %v842, 7
        %v844 = vsub.s32 3, %v843
        %v845 = vrot.slane %v253, %v844
        %v846 = vlaneseq
        %v847 = vshrl.u32 %v846, 7
        %v848 = vsub.s32 7, %v847
        %v849 = vrot.slane %v253, %v848
        %v850 = vlaneseq
        %v851 = vshrl.u32 %v850, 7
        %v852 = vsub.s32 3, %v851
        %v853 = vrot.slane %v254, %v852
        %v854 = vlaneseq
        %v855 = vshrl.u32 %v854, 7
        %v856 = vsub.s32 7, %v855
        %v857 = vrot.slane %v254, %v856
        %v858 = vlaneseq
        %v859 = vshrl.u32 %v858, 7
        %v860 = vsub.s32 3, %v859
        %v861 = vrot.slane %v255, %v860
        %v862 = vlaneseq
        %v863 = vshrl.u32 %v862, 7
        %v864 = vsub.s32 7, %v863
        %v865 = vrot.slane %v255, %v864
        %v866 = vlaneseq
        %v867 = vshrl.u32 %v866, 7
        %v868 = vsub.s32 3, %v867
        %v869 = vrot.slane %v256, %v868
        %v870 = vlaneseq
        %v871 = vshrl.u32 %v870, 7
        %v872 = vsub.s32 7, %v871
        %v873 = vrot.slane %v256, %v872
        %v874 = vlaneseq
        %v875 = vshrl.u32 %v874, 7
        %v876 = vsub.s32 3, %v875
        %v877 = vrot.slane %v257, %v876
        %v878 = vlaneseq
        %v879 = vshrl.u32 %v878, 7
        %v880 = vsub.s32 7, %v879
        %v881 = vrot.slane %v257, %v880
        %v898 = vlaneseq
        %v899 = vshrl.u32 %v898, 7
        %v900 = vsub.s32 3, %v899
        %v901 = vrot.slane %v821, %v900
        %v902 = vlaneseq
        %v903 = vshrl.u32 %v902, 7
        %v904 = vsub.s32 3, %v903
        %v905 = vrot.slane %v825, %v904
        %v906 = vlaneseq
        %v907 = vshrl.u32 %v906, 7
        %v908 = vsub.s32 3, %v907
        %v909 = vrot.slane %v829, %v908
        %v910 = vlaneseq
        %v911 = vshrl.u32 %v910, 7
        %v912 = vsub.s32 3, %v911
        %v913 = vrot.slane %v833, %v912
        %v914 = vlaneseq
        %v915 = vshrl.u32 %v914, 7
        %v916 = vsub.s32 3, %v915
        %v917 = vrot.slane %v837, %v916
        %v918 = vlaneseq
        %v919 = vshrl.u32 %v918, 7
        %v920 = vsub.s32 3, %v919
        %v921 = vrot.slane %v841, %v920
        %v922 = vlaneseq
        %v923 = vshrl.u32 %v922, 7
        %v924 = vsub.s32 3, %v923
        %v925 = vrot.slane %v845, %v924
        %v926 = vlaneseq
        %v927 = vshrl.u32 %v926, 7
        %v928 = vsub.s32 3, %v927
        %v929 = vrot.slane %v849, %v928
        %v930 = vlaneseq
        %v931 = vshrl.u32 %v930, 7
        %v932 = vsub.s32 3, %v931
        %v933 = vrot.slane %v853, %v932
        %v934 = vlaneseq
        %v935 = vshrl.u32 %v934, 7
        %v936 = vsub.s32 3, %v935
        %v937 = vrot.slane %v857, %v936
        %v938 = vlaneseq
        %v939 = vshrl.u32 %v938, 7
        %v940 = vsub.s32 3, %v939
        %v941 = vrot.slane %v861, %v940
        %v942 = vlaneseq
        %v943 = vshrl.u32 %v942, 7
        %v944 = vsub.s32 3, %v943
        %v945 = vrot.slane %v865, %v944
        %v946 = vlaneseq
        %v947 = vshrl.u32 %v946, 7
        %v948 = vsub.s32 3, %v947
        %v949 = vrot.slane %v869, %v948
        %v950 = vlaneseq
        %v951 = vshrl.u32 %v950, 7
        %v952 = vsub.s32 3, %v951
        %v953 = vrot.slane %v873, %v952
        %v954 = vlaneseq
        %v955 = vshrl.u32 %v954, 7
        %v956 = vsub.s32 3, %v955
        %v957 = vrot.slane %v877, %v956
        %v958 = vlaneseq
        %v959 = vshrl.u32 %v958, 7
        %v960 = vsub.s32 3, %v959
        %v961 = vrot.slane %v881, %v960
        %v962 = vmul.f32 %v816, %v901
        %v963 = vmul.f32 %v816, %v905
        %v964 = vmul.f32 %v816, %v909
        %v965 = vmul.f32 %v816, %v913
        %v966 = vmul.f32 %v816, %v917
        %v967 = vmul.f32 %v816, %v921
        %v968 = vmul.f32 %v816, %v925
        %v969 = vmul.f32 %v816, %v929
        %v970 = vmul.f32 %v816, %v933
        %v971 = vmul.f32 %v816, %v937
        %v972 = vmul.f32 %v816, %v941
        %v973 = vmul.f32 %v816, %v945
        %v974 = vmul.f32 %v816, %v949
        %v975 = vmul.f32 %v816, %v953
        %v976 = vmul.f32 %v816, %v957
        %v977 = vmul.f32 %v816, %v961
        %v978 = vadd.f32 %v798, %v962
        %v979 = vadd.f32 %v799, %v963
        %v980 = vadd.f32 %v800, %v964
        %v981 = vadd.f32 %v801, %v965
        %v982 = vadd.f32 %v802, %v966
        %v983 = vadd.f32 %v803, %v967
        %v984 = vadd.f32 %v804, %v968
        %v985 = vadd.f32 %v805, %v969
        %v986 = vadd.f32 %v806, %v970
        %v987 = vadd.f32 %v807, %v971
        %v988 = vadd.f32 %v808, %v972
        %v989 = vadd.f32 %v809, %v973
        %v990 = vadd.f32 %v810, %v974
        %v991 = vadd.f32 %v811, %v975
        %v992 = vadd.f32 %v812, %v976
        %v993 = vadd.f32 %v813, %v977
        %994 = vst [vmem:[%s239] sm:$0xff] %v978
        %995 = vst [vmem:[%s239 + $0x8] sm:$0xff] %v979
        %996 = vst [vmem:[%s239 + $0x10] sm:$0xff] %v980
        %997 = vst [vmem:[%s239 + $0x18] sm:$0xff] %v981
        %998 = vst [vmem:[%s239 + $0x20] sm:$0xff] %v982
        %999 = vst [vmem:[%s239 + $0x28] sm:$0xff] %v983
        %1000 = vst [vmem:[%s239 + $0x30] sm:$0xff] %v984
        %1001 = vst [vmem:[%s239 + $0x38] sm:$0xff] %v985
        %1002 = vst [vmem:[%s239 + $0x40] sm:$0xff] %v986
        %1003 = vst [vmem:[%s239 + $0x48] sm:$0xff] %v987
        %1004 = vst [vmem:[%s239 + $0x50] sm:$0xff] %v988
        %1005 = vst [vmem:[%s239 + $0x58] sm:$0xff] %v989
        %1006 = vst [vmem:[%s239 + $0x60] sm:$0xff] %v990
        %1007 = vst [vmem:[%s239 + $0x68] sm:$0xff] %v991
        %1008 = vst [vmem:[%s239 + $0x70] sm:$0xff] %v992
        %1009 = vst [vmem:[%s239 + $0x78] sm:$0xff] %v993
        %s1010 = sand.u32 %s131, 1
        %s1011 = scalar_lea.sflag [#allocation4], %s1010
        %s1012 = sand.u32 %s131, 1
        %s1013 = smul.addr %s1012, 128
        %s1014 = scalar_lea.vmem [#allocation5], %s1013
        // Predicated region
        $region37: #{tpu_custom_call.1} parent=31 // pred_check
          %p1015 = pneg %p141
        $region38: #{tpu_custom_call.1} parent=31 // pred_check_branch
          %1017 = sbr.rel (%p1015) target = $region40
        $region39: #{tpu_custom_call.1} parent=31 // pred_region
          %s1018 = smul.u32 16, %s27
          %s1020 = ssub.s32 2048, 2048
          %1021 = vsyncadd %s1011, %s1020
          %s1022 = smul.addr %s26, 32
          %s1023 = sadd.s32 %s1018, %s1022
          %s1024 = smul.addr %s25, 32
          %s1025 = sadd.s32 %s1023, %s1024
          %s1026 = smul.addr %s1025, 128
          %s1027 = scalar_lea.hbm %s3, %s1026
          %s1029 = sshll.u32 %s1014, 4
          %s1030 = int_to_ptr.vmem [resolvable:$true] %s1029
          %1032 = dma.vmem_to_hbm [thread:$0]  %s1030, 2048, %s1027, %s1011
        $region40: #{tpu_custom_call.1} parent=31 // pred_fallthru
          _
      $region32: #{tpu_custom_call.1} parent=5 // pred_fallthru
        _
      %p1033 = scmp.le.s32.totalorder 2, %s15
      // Predicated region
      $region41: #{tpu_custom_call.1} parent=5 // pred_check
        %p1034 = pneg %p1033
      $region42: #{tpu_custom_call.1} parent=5 // pred_check_branch
        %1036 = sbr.rel (%p1034) target = $region44
      $region43: #{tpu_custom_call.1} parent=5 // pred_region
        %s1037 = ssub.s32 %s15, 2
        // Predicated region
        $region45: #{tpu_custom_call.1} parent=43 // pred_check
          %p1038 = pneg %p147
        $region46: #{tpu_custom_call.1} parent=43 // pred_check_branch
          %1040 = sbr.rel (%p1038) target = $region48
        $region47: #{tpu_custom_call.1} parent=43 // pred_region
          %s1041 = sand.u32 %s132, 1
          %s1042 = scalar_lea.sflag [#allocation4], %s1041
          %s1043 = sand.u32 %s132, 1
          %s1044 = smul.addr %s1043, 128
          %s1045 = scalar_lea.vmem [#allocation5], %s1044
          %1046 = dma.done %s1042, 2048
        $region48: #{tpu_custom_call.1} parent=43 // pred_fallthru
          _
      $region44: #{tpu_custom_call.1} parent=5 // pred_fallthru
        _
    $region6: #{tpu_custom_call.1} parent=1 // loop_footer
      %s19 = sadd.s32 1, %s15
    $region7: #{tpu_custom_call.1} parent=1 // loop_footer_branch
      %14 = sbr.rel target = $region3
    $region8: #{tpu_custom_call.1} parent=1 // loop_exit
      _
    %1047 = vsyncpa [#allocation3], 1
    %s1048 = scalar_lea.sflag [#allocation3], 1
    %1049 = vsyncpa %s1048, 1
    %1050 = vsyncpa [#allocation4], 1
    %s1051 = scalar_lea.sflag [#allocation4], 1
    %1052 = vsyncpa %s1051, 1

</llo_original>
